<compile_context>
chip_gen: v6e
topology: v6e:2x2x1
jax: 0.10.0
libtpu: 0.0.40
codegen_flags: <defaults>
</compile_context>

<pallas_src>
import functools

import jax
import jax.numpy as jnp
from jax.experimental import pallas as pl
from jax.experimental.pallas import tpu as pltpu

EPS = 1e-5
LANE = 128
ACT_DTYPE = jnp.bfloat16               # HBM activations / MXU inputs


# ------------------------------ small helpers ------------------------------ #

def _round_up(x, k):
    return (x + k - 1) // k * k


def _tpu_budgets():
    """(vmem_limit_bytes, row-tile double-buffer budget) per TPU generation.
    v5e/v6e have 128 MiB VMEM -> large tiles; v7x (64 MiB/TC) keeps the
    conservative sizing. Falls back to the v7x-safe values if the query fails."""
    try:
        vmem = int(pltpu.get_tpu_info().vmem_capacity_bytes)
    except Exception:
        vmem = 64 * 1024 * 1024
    if vmem >= 96 * 1024 * 1024:
        return 96 * 1024 * 1024, 24 * 1024 * 1024
    return 48 * 1024 * 1024, 8 * 1024 * 1024


def _resident(shape):
    # TODO(synk): pipeline_mode=pl.Buffered(1) on these block-invariant specs
    # would reclaim the second buffer inside v7x's tighter VMEM budget.
    n = len(shape)
    return pl.BlockSpec(shape, lambda *_: (0,) * n)


def _pick_row_tile(m, row_bytes, budget):
    """Largest sublane-aligned divisor of M whose double-buffered row tiles fit
    the budget; if none fits, the smallest aligned divisor (minimal VMEM)."""
    divs = [d for d in range(8, m + 1, 8) if m % d == 0]
    fits = [d for d in divs if 2 * d * row_bytes <= budget]
    if fits:
        return max(fits)
    if divs:
        return min(divs)
    return m      # M not a multiple of 8: single full block (small shapes only)


def _row_grid(m, tm, max_slots=2):
    """Split the row-block axis into (slots, inner) so the slot axis can be
    'parallel' (per-slot BN-stat accumulators -> megacore-shardable)."""
    steps = m // tm
    slots = max_slots if steps % max_slots == 0 else 1
    return slots, steps // slots


def _cparams(semantics, vmem_limit):
    return pltpu.CompilerParams(dimension_semantics=semantics,
                                vmem_limit_bytes=vmem_limit)


# ----------------------------- Pallas kernels ------------------------------ #

def _accum_stats(sum_ref, sq_ref, z, is_first):
    """BN pass 1: accumulate per-channel sum / sum-of-squares (f32)."""
    @pl.when(is_first)
    def _():
        sum_ref[...] = jnp.zeros_like(sum_ref)
        sq_ref[...] = jnp.zeros_like(sq_ref)
    sum_ref[...] += jnp.sum(z, axis=0, keepdims=True)
    sq_ref[...] += jnp.sum(z * z, axis=0, keepdims=True)


def conv1_kernel(x_ref, w1_ref, z1_ref, s1_ref, q1_ref):
    """1x1 conv (matmul) + BN1 stats (per-slot accumulator)."""
    first = pl.program_id(1) == 0
    z = jnp.dot(x_ref[...], w1_ref[...], preferred_element_type=jnp.float32)
    _accum_stats(s1_ref, q1_ref, z, first)
    z1_ref[...] = z.astype(z1_ref.dtype)


def conv1_dual_kernel(x_ref, w1_ref, ws_ref,
                      z1_ref, zs_ref, s1_ref, q1_ref, ss_ref, qs_ref):
    """conv1 + projection-shortcut conv fused (both read the same x tile)."""
    first = pl.program_id(1) == 0
    x = x_ref[...]
    z = jnp.dot(x, w1_ref[...], preferred_element_type=jnp.float32)
    _accum_stats(s1_ref, q1_ref, z, first)
    z1_ref[...] = z.astype(z1_ref.dtype)
    zs = jnp.dot(x, ws_ref[...], preferred_element_type=jnp.float32)
    _accum_stats(ss_ref, qs_ref, zs, first)
    zs_ref[...] = zs.astype(zs_ref.dtype)


def conv3x3_kernel(z1_ref, sc_ref, bi_ref, w2_ref, z2_ref, s2_ref, q2_ref,
                   pad_ref, *, ho, wo, cp):
    """BN1 affine + ReLU fused into the load, 3x3 conv as 3 K=3*cp matmuls.

    pad_ref is a bf16 (ho+2, wo, 3*cp) scratch holding the zero-bordered,
    column-shifted input: pad_ref[r, c, kw*cp:(kw+1)*cp] == padded[r, c+kw, :].
    Each kh tap is then a cheap major-axis slice feeding one MXU matmul with a
    full 3*cp contraction (fills the 256-deep MXU on v6e/v7x)."""
    # Zero every step: the never-written border cells must be 0, and the
    # scratch is per-core under "parallel" semantics so a b==0-only init is
    # not safe.  Cost is negligible vs the matmuls.
    pad_ref[...] = jnp.zeros_like(pad_ref)

    y = jnp.maximum(z1_ref[0].astype(jnp.float32) * sc_ref[0] + bi_ref[0], 0.0)
    yb = y.astype(pad_ref.dtype)                        # single f32->bf16 cast
    pad_ref[1:ho + 1, :, cp:2 * cp] = yb                # kw = 1 (center tap)
    if wo > 1:
        pad_ref[1:ho + 1, 1:wo, 0:cp] = yb[:, :wo - 1, :]            # kw = 0
        pad_ref[1:ho + 1, 0:wo - 1, 2 * cp:3 * cp] = yb[:, 1:wo, :]  # kw = 2

    acc = jnp.zeros((ho * wo, cp), jnp.float32)
    for kh in range(3):                                 # unrolled: 3 matmuls
        slab = pad_ref[kh:kh + ho].reshape(ho * wo, 3 * cp)
        acc += jnp.dot(slab, w2_ref[kh], preferred_element_type=jnp.float32)

    s2_ref[...] = jnp.sum(acc, axis=0, keepdims=True)   # per-image stat slot
    q2_ref[...] = jnp.sum(acc * acc, axis=0, keepdims=True)
    z2_ref[...] = acc.reshape(z2_ref.shape).astype(z2_ref.dtype)


def bn_relu_conv_kernel(z_ref, sc_ref, bi_ref, w_ref, o_ref, s_ref, q_ref):
    """BN2 affine + ReLU fused into the load, 1x1 conv3, BN3 stats."""
    first = pl.program_id(1) == 0
    y = jnp.maximum(z_ref[...].astype(jnp.float32) * sc_ref[...] + bi_ref[...],
                    0.0)
    z = jnp.dot(y.astype(w_ref.dtype), w_ref[...],
                preferred_element_type=jnp.float32)
    _accum_stats(s_ref, q_ref, z, first)
    o_ref[...] = z.astype(o_ref.dtype)


def final_proj_kernel(z3_ref, zs_ref, c3_ref, d3_ref, cs_ref, ds_ref, o_ref):
    """BN3 affine + shortcut-BN affine + residual add + ReLU (projection)."""
    y = z3_ref[...].astype(jnp.float32) * c3_ref[...] + d3_ref[...]
    s = zs_ref[...].astype(jnp.float32) * cs_ref[...] + ds_ref[...]
    o_ref[...] = jnp.maximum(y + s, 0.0)


def final_identity_kernel(z3_ref, x_ref, c3_ref, d3_ref, o_ref):
    """BN3 affine + identity-shortcut (bf16) residual add + ReLU."""
    y = z3_ref[...].astype(jnp.float32) * c3_ref[...] + d3_ref[...]
    o_ref[...] = jnp.maximum(y + x_ref[...].astype(jnp.float32), 0.0)


# ------------------------------- forward pass ------------------------------ #

def _bn_scale_bias(ssum, ssq, count, gamma, beta):
    """Fold BN batch stats + affine into one per-channel (scale, bias)."""
    mean = ssum / count
    var = jnp.maximum(ssq / count - mean * mean, 0.0)
    scale = gamma * jax.lax.rsqrt(var + EPS)
    bias = beta - mean * scale
    return scale, bias


def _fold_slots(stats, slots, cols):
    """(1, slots*cols) lane-packed per-slot stats -> (1, cols) total."""
    return stats.reshape(slots, cols).sum(axis=0, keepdims=True)


def bottleneck_forward(x_nchw, params, stride):
    n = x_nchw.shape[0]
    cin = x_nchw.shape[1]
    c = params["channels"]
    cout = 4 * c
    cin_p, c_p, cout_p = params["cin_p"], params["c_p"], params["cout_p"]
    identity = params["identity"]
    vmem_limit, tile_budget = _tpu_budgets()

    # Input prep: stride subsample, NCHW->NHWC, lane pad, bf16 (one XLA copy).
    # TODO(synk): fold this repack into conv1's index_map / a manual strided
    # DMA to drop the extra HBM pass entirely.
    xs = jnp.transpose(x_nchw[:, :, ::stride, ::stride], (0, 2, 3, 1))
    ho, wo = xs.shape[1], xs.shape[2]
    m = n * ho * wo
    xs_bf = jnp.pad(xs, ((0, 0), (0, 0), (0, 0), (0, cin_p - cin))
                    ).reshape(m, cin_p).astype(ACT_DTYPE)

    # ---- kernel 1: conv1 (+ projection shortcut) + BN stats --------------- #
    row_b1 = 2 * (cin_p + c_p) + (0 if identity else 2 * cout_p)
    tm1 = _pick_row_tile(m, row_b1, tile_budget)
    slots1, inner1 = _row_grid(m, tm1)
    row1 = lambda s, i: (s * inner1 + i, 0)
    stat1 = lambda s, i: (0, s)

    if identity:
        z1, s1, q1 = pl.pallas_call(
            conv1_kernel, grid=(slots1, inner1),
            in_specs=[pl.BlockSpec((tm1, cin_p), row1),
                      _resident((cin_p, c_p))],
            out_shape=(jax.ShapeDtypeStruct((m, c_p), ACT_DTYPE),
                       jax.ShapeDtypeStruct((1, slots1 * c_p), jnp.float32),
                       jax.ShapeDtypeStruct((1, slots1 * c_p), jnp.float32)),
            out_specs=(pl.BlockSpec((tm1, c_p), row1),
                       pl.BlockSpec((1, c_p), stat1),
                       pl.BlockSpec((1, c_p), stat1)),
            compiler_params=_cparams(("parallel", "arbitrary"), vmem_limit),
        )(xs_bf, params["w1"])
    else:
        z1, zs, s1, q1, ss, qs = pl.pallas_call(
            conv1_dual_kernel, grid=(slots1, inner1),
            in_specs=[pl.BlockSpec((tm1, cin_p), row1),
                      _resident((cin_p, c_p)), _resident((cin_p, cout_p))],
            out_shape=(jax.ShapeDtypeStruct((m, c_p), ACT_DTYPE),
                       jax.ShapeDtypeStruct((m, cout_p), ACT_DTYPE),
                       jax.ShapeDtypeStruct((1, slots1 * c_p), jnp.float32),
                       jax.ShapeDtypeStruct((1, slots1 * c_p), jnp.float32),
                       jax.ShapeDtypeStruct((1, slots1 * cout_p), jnp.float32),
                       jax.ShapeDtypeStruct((1, slots1 * cout_p), jnp.float32)),
            out_specs=(pl.BlockSpec((tm1, c_p), row1),
                       pl.BlockSpec((tm1, cout_p), row1),
                       pl.BlockSpec((1, c_p), stat1),
                       pl.BlockSpec((1, c_p), stat1),
                       pl.BlockSpec((1, cout_p), stat1),
                       pl.BlockSpec((1, cout_p), stat1)),
            compiler_params=_cparams(("parallel", "arbitrary"), vmem_limit),
        )(xs_bf, params["w1"], params["ws"])
    sc1, bi1 = _bn_scale_bias(_fold_slots(s1, slots1, c_p),
                              _fold_slots(q1, slots1, c_p),
                              float(m), params["g1"], params["b1"])

    # ---- kernel 2: BN1+ReLU -> 3x3 conv (3 K=3*c_p matmuls) + BN2 stats --- #
    # TODO(synk): tile over row-bands of the image (halo DMA) instead of whole
    # images for finer pipelining on large feature maps.
    z2, s2, q2 = pl.pallas_call(
        functools.partial(conv3x3_kernel, ho=ho, wo=wo, cp=c_p),
        grid=(n,),
        in_specs=[pl.BlockSpec((1, ho, wo, c_p), lambda b: (b, 0, 0, 0)),
                  _resident((1, c_p)), _resident((1, c_p)),
                  _resident((3, 3 * c_p, c_p))],
        out_shape=(jax.ShapeDtypeStruct((n, ho, wo, c_p), ACT_DTYPE),
                   jax.ShapeDtypeStruct((1, n * c_p), jnp.float32),
                   jax.ShapeDtypeStruct((1, n * c_p), jnp.float32)),
        out_specs=(pl.BlockSpec((1, ho, wo, c_p), lambda b: (b, 0, 0, 0)),
                   pl.BlockSpec((1, c_p), lambda b: (0, b)),
                   pl.BlockSpec((1, c_p), lambda b: (0, b))),
        scratch_shapes=[pltpu.VMEM((ho + 2, wo, 3 * c_p), ACT_DTYPE)],
        compiler_params=_cparams(("parallel",), vmem_limit),
    )(z1.reshape(n, ho, wo, c_p), sc1, bi1, params["w2"])
    sc2, bi2 = _bn_scale_bias(_fold_slots(s2, n, c_p),
                              _fold_slots(q2, n, c_p),
                              float(m), params["g2"], params["b2"])

    # ---- kernel 3: BN2+ReLU -> conv3 (1x1) + BN3 stats --------------------- #
    row_b3 = 2 * (c_p + cout_p)
    tm3 = _pick_row_tile(m, row_b3, tile_budget)
    slots3, inner3 = _row_grid(m, tm3)
    row3 = lambda s, i: (s * inner3 + i, 0)
    stat3 = lambda s, i: (0, s)
    z3, s3, q3 = pl.pallas_call(
        bn_relu_conv_kernel, grid=(slots3, inner3),
        in_specs=[pl.BlockSpec((tm3, c_p), row3),
                  _resident((1, c_p)), _resident((1, c_p)),
                  _resident((c_p, cout_p))],
        out_shape=(jax.ShapeDtypeStruct((m, cout_p), ACT_DTYPE),
                   jax.ShapeDtypeStruct((1, slots3 * cout_p), jnp.float32),
                   jax.ShapeDtypeStruct((1, slots3 * cout_p), jnp.float32)),
        out_specs=(pl.BlockSpec((tm3, cout_p), row3),
                   pl.BlockSpec((1, cout_p), stat3),
                   pl.BlockSpec((1, cout_p), stat3)),
        compiler_params=_cparams(("parallel", "arbitrary"), vmem_limit),
    )(z2.reshape(m, c_p), sc2, bi2, params["w3"])
    sc3, bi3 = _bn_scale_bias(_fold_slots(s3, slots3, cout_p),
                              _fold_slots(q3, slots3, cout_p),
                              float(m), params["g3"], params["b3"])

    # ---- kernel 4: BN3 (+ shortcut BN) + residual add + final ReLU --------- #
    if identity:
        row_b4 = 2 * cout_p + 2 * cin_p + 4 * cout_p
        tm4 = _pick_row_tile(m, row_b4, tile_budget)
        out2d = pl.pallas_call(
            final_identity_kernel, grid=(m // tm4,),
            in_specs=[pl.BlockSpec((tm4, cout_p), lambda i: (i, 0)),
                      pl.BlockSpec((tm4, cin_p), lambda i: (i, 0)),
                      _resident((1, cout_p)), _resident((1, cout_p))],
            out_shape=jax.ShapeDtypeStruct((m, cout_p), jnp.float32),
            out_specs=pl.BlockSpec((tm4, cout_p), lambda i: (i, 0)),
            compiler_params=_cparams(("parallel",), vmem_limit),
        )(z3, xs_bf, sc3, bi3)
    else:
        scs, bis = _bn_scale_bias(_fold_slots(ss, slots1, cout_p),
                                  _fold_slots(qs, slots1, cout_p),
                                  float(m), params["gs"], params["bs"])
        row_b4 = 2 * cout_p + 2 * cout_p + 4 * cout_p
        tm4 = _pick_row_tile(m, row_b4, tile_budget)
        out2d = pl.pallas_call(
            final_proj_kernel, grid=(m // tm4,),
            in_specs=[pl.BlockSpec((tm4, cout_p), lambda i: (i, 0)),
                      pl.BlockSpec((tm4, cout_p), lambda i: (i, 0)),
                      _resident((1, cout_p)), _resident((1, cout_p)),
                      _resident((1, cout_p)), _resident((1, cout_p))],
            out_shape=jax.ShapeDtypeStruct((m, cout_p), jnp.float32),
            out_specs=pl.BlockSpec((tm4, cout_p), lambda i: (i, 0)),
            compiler_params=_cparams(("parallel",), vmem_limit),
        )(z3, zs, sc3, bi3, scs, bis)

    # TODO(synk): keep NHWC (and slice channels lazily) if the consumer allows;
    # this final relayout is one extra XLA pass over the largest tensor.
    out = out2d.reshape(n, ho, wo, cout_p)[..., :cout]
    return jnp.transpose(out, (0, 3, 1, 2))          # back to NCHW


# ------------------------- deterministic parameters ------------------------ #

def make_params(key, in_channels, channels, stride):
    cout = 4 * channels
    cin_p = _round_up(in_channels, LANE)
    c_p = _round_up(channels, LANE)
    cout_p = _round_up(cout, LANE)
    ks = jax.random.split(key, 10)

    w1_pt = 0.1 * jax.random.normal(ks[0], (channels, in_channels, 1, 1),
                                    jnp.float32)
    w2_pt = 0.1 * jax.random.normal(ks[1], (channels, channels, 3, 3),
                                    jnp.float32)
    w3_pt = 0.1 * jax.random.normal(ks[2], (cout, channels, 1, 1), jnp.float32)
    ws_pt = 0.1 * jax.random.normal(ks[3], (cout, in_channels, 1, 1),
                                    jnp.float32)

    def pad_mat(wm, rows, cols):
        return jnp.pad(wm, ((0, rows - wm.shape[0]),
                            (0, cols - wm.shape[1]))).astype(ACT_DTYPE)

    def pad_vec(v, cols):
        return jnp.pad(v, (0, cols - v.shape[0])).reshape(1, cols).astype(
            jnp.float32)

    # 3x3 weight packed as (kh, 3*Cin_p, Cout_p): for each kh the three
    # kw-shifted (Cin, Cout) taps are concatenated along the contraction axis
    # so the conv runs as 3 matmuls with K = 3*c_p (fills a 256-deep MXU).
    w2_k = jnp.transpose(w2_pt, (2, 3, 1, 0))            # (kh, kw, cin, cout)
    w2_k = jnp.pad(w2_k, ((0, 0), (0, 0), (0, c_p - channels),
                          (0, c_p - channels)))
    w2 = w2_k.reshape(3, 3 * c_p, c_p).astype(ACT_DTYPE)

    g1 = 1.0 + 0.1 * jax.random.normal(ks[4], (channels,), jnp.float32)
    b1 = 0.1 * jax.random.normal(ks[5], (channels,), jnp.float32)
    g2 = 1.0 + 0.1 * jax.random.normal(ks[6], (channels,), jnp.float32)
    b2 = 0.1 * jax.random.normal(ks[7], (channels,), jnp.float32)
    g3 = 1.0 + 0.1 * jax.random.normal(ks[8], (cout,), jnp.float32)
    b3 = 0.1 * jax.random.normal(ks[9], (cout,), jnp.float32)

    return dict(
        channels=channels, cin_p=cin_p, c_p=c_p, cout_p=cout_p,
        identity=(in_channels == cout and stride == 1),
        # lane-padded, bf16, matmul-layout weights for the kernels
        w1=pad_mat(w1_pt[:, :, 0, 0].T, cin_p, c_p),
        w2=w2,
        w3=pad_mat(w3_pt[:, :, 0, 0].T, c_p, cout_p),
        ws=pad_mat(ws_pt[:, :, 0, 0].T, cin_p, cout_p),
        # lane-padded f32 BN affine parameters
        g1=pad_vec(g1, c_p), b1=pad_vec(b1, c_p),
        g2=pad_vec(g2, c_p), b2=pad_vec(b2, c_p),
        g3=pad_vec(g3, cout_p), b3=pad_vec(b3, cout_p),
        gs=pad_vec(jnp.ones((cout,), jnp.float32), cout_p),
        bs=pad_vec(jnp.zeros((cout,), jnp.float32), cout_p),
        # PyTorch-layout f32 weights for the reference
        _w1_pt=w1_pt, _w2_pt=w2_pt, _w3_pt=w3_pt, _ws_pt=ws_pt,
    )


# ---------------------------- pure-JAX reference ---------------------------- #

def ref_forward(x_nchw, p, stride):
    """BottleneckArch.forward (training-mode BN) under the same mixed-precision
    policy as the kernels: bf16 conv inputs, f32 accumulation, activations
    rounded to bf16 between layers (incl. the identity shortcut), BN
    stats/epilogues in f32."""
    c = p["channels"]
    cout = 4 * c

    def conv(xf, wf, s, pad):
        return jax.lax.conv_general_dilated(
            xf.astype(ACT_DTYPE), wf.astype(ACT_DTYPE),
            window_strides=(s, s), padding=[(pad, pad), (pad, pad)],
            dimension_numbers=("NCHW", "OIHW", "NCHW"),
            preferred_element_type=jnp.float32)

    def bn(zf, g, b):
        mean = zf.mean(axis=(0, 2, 3), keepdims=True)
        var = jnp.maximum((zf * zf).mean(axis=(0, 2, 3), keepdims=True)
                          - mean * mean, 0.0)
        scale = g.reshape(1, -1, 1, 1) * jax.lax.rsqrt(var + EPS)
        bias = b.reshape(1, -1, 1, 1) - mean * scale
        zb = zf.astype(ACT_DTYPE).astype(jnp.float32)   # bf16 HBM round-trip
        return zb * scale + bias

    x = x_nchw.astype(jnp.float32)
    y = jax.nn.relu(bn(conv(x, p["_w1_pt"], stride, 0),
                       p["g1"][0, :c], p["b1"][0, :c]))
    y = jax.nn.relu(bn(conv(y, p["_w2_pt"], 1, 1),
                       p["g2"][0, :c], p["b2"][0, :c]))
    y = bn(conv(y, p["_w3_pt"], 1, 0), p["g3"][0, :cout], p["b3"][0, :cout])
    if p["identity"]:
        sc = x.astype(ACT_DTYPE).astype(jnp.float32)    # bf16 shortcut read
    else:
        sc = bn(conv(x, p["_ws_pt"], stride, 0),
                p["gs"][0, :cout], p["bs"][0, :cout])
    return jax.nn.relu(y + sc)


# ---------------------------------- main ------------------------------------ #

if __name__ == "__main__":
    key = jax.random.PRNGKey(0)
    configs = [
        (4, 4, 2, (2, 4, 16, 16)),      # projection shortcut, stride 2
        (16, 4, 1, (2, 16, 16, 16)),    # identity shortcut
    ]
    for idx, (cin, ch, stride, xshape) in enumerate(configs):
        kx, kp = jax.random.split(jax.random.fold_in(key, idx))
        x = jax.random.normal(kx, xshape, jnp.float32)
        params = make_params(kp, cin, ch, stride)

        out = jax.block_until_ready(bottleneck_forward(x, params, stride))
        ref = jax.block_until_ready(ref_forward(x, params, stride))

        expect = (xshape[0], 4 * ch, xshape[2] // stride, xshape[3] // stride)
        assert out.shape == expect, (out.shape, expect)
        err = jnp.abs(out - ref)
        # bf16 double-rounding of intermediates may differ by ~1 ulp between
        # the kernel and the XLA reference; structural bugs would be O(0.1-1).
        assert float(jnp.max(err)) < 1e-2, float(jnp.max(err))
        assert float(jnp.mean(err)) < 1e-3, float(jnp.mean(err))
    print("KERNEL_OK")
</pallas_src>

<mosaic_0001>
module attributes {stable_mosaic.version = 11 : i64} {
  func.func @conv1_dual_kernel(%arg0: i32, %arg1: i32, %arg2: memref<128x128xbf16, #tpu.memory_space<vmem>>, %arg3: memref<128x128xbf16, #tpu.memory_space<vmem>>, %arg4: memref<128x128xbf16, #tpu.memory_space<vmem>>, %arg5: memref<128x128xbf16, #tpu.memory_space<vmem>>, %arg6: memref<128x128xbf16, #tpu.memory_space<vmem>>, %arg7: memref<1x128xf32, #tpu.memory_space<vmem>>, %arg8: memref<1x128xf32, #tpu.memory_space<vmem>>, %arg9: memref<1x128xf32, #tpu.memory_space<vmem>>, %arg10: memref<1x128xf32, #tpu.memory_space<vmem>>) attributes {dimension_semantics = [#tpu.dimension_semantics<parallel>, #tpu.dimension_semantics<arbitrary>], iteration_bounds = array<i64: 1, 1>, scalar_prefetch = 0 : i64, scratch_operands = 0 : i64, tpu.core_type = #tpu.core_type<tc>, window_params = [{transform_indices = @transform_0, window_bounds = array<i64: 128, 128>}, {pipeline_mode = #tpu.pipeline_mode<synchronous>, transform_indices = @transform_1, window_bounds = array<i64: 128, 128>}, {pipeline_mode = #tpu.pipeline_mode<synchronous>, transform_indices = @transform_2, window_bounds = array<i64: 128, 128>}, {transform_indices = @transform_3, window_bounds = array<i64: 128, 128>}, {transform_indices = @transform_4, window_bounds = array<i64: 128, 128>}, {transform_indices = @transform_5, window_bounds = array<i64: 1, 128>}, {transform_indices = @transform_6, window_bounds = array<i64: 1, 128>}, {transform_indices = @transform_7, window_bounds = array<i64: 1, 128>}, {transform_indices = @transform_8, window_bounds = array<i64: 1, 128>}]} {
    %c0_i32 = arith.constant 0 : i32
    %0 = arith.cmpi eq, %arg1, %c0_i32 : i32
    %c0 = arith.constant 0 : index
    %c0_0 = arith.constant 0 : index
    %1 = vector.load %arg2[%c0, %c0_0] : memref<128x128xbf16, #tpu.memory_space<vmem>>, vector<128x128xbf16>
    %c0_1 = arith.constant 0 : index
    %c0_2 = arith.constant 0 : index
    %2 = vector.load %arg3[%c0_1, %c0_2] : memref<128x128xbf16, #tpu.memory_space<vmem>>, vector<128x128xbf16>
    %cst = arith.constant dense<0.000000e+00> : vector<128x128xf32>
    %3 = tpu.matmul %1, %2, %cst {dimension_numbers = #tpu.dot_dimension_numbers<[1], [0], [0], [1], [0, 0, 1, 1], [], []>} : vector<128x128xbf16>, vector<128x128xbf16>, vector<128x128xf32> -> vector<128x128xf32>
    %4 = arith.extui %0 : i1 to i32
    %c0_i32_3 = arith.constant 0 : i32
    %5 = arith.cmpi ne, %4, %c0_i32_3 : i32
    scf.if %5 {
      %cst_32 = arith.constant 0.000000e+00 : f32
      %36 = vector.broadcast %cst_32 : f32 to vector<1x128xf32>
      %c0_33 = arith.constant 0 : index
      %c0_34 = arith.constant 0 : index
      %37 = vector.load %arg7[%c0_33, %c0_34] : memref<1x128xf32, #tpu.memory_space<vmem>>, vector<1x128xf32>
      tpu.vector_store %arg7[%c0_33, %c0_34], %36 {strides = array<i32>} : memref<1x128xf32, #tpu.memory_space<vmem>>, vector<1x128xf32>,
      %cst_35 = arith.constant 0.000000e+00 : f32
      %38 = vector.broadcast %cst_35 : f32 to vector<1x128xf32>
      %c0_36 = arith.constant 0 : index
      %c0_37 = arith.constant 0 : index
      %39 = vector.load %arg8[%c0_36, %c0_37] : memref<1x128xf32, #tpu.memory_space<vmem>>, vector<1x128xf32>
      tpu.vector_store %arg8[%c0_36, %c0_37], %38 {strides = array<i32>} : memref<1x128xf32, #tpu.memory_space<vmem>>, vector<1x128xf32>,
    } else {
    }
    %c0_4 = arith.constant 0 : index
    %c0_5 = arith.constant 0 : index
    %6 = vector.load %arg7[%c0_4, %c0_5] : memref<1x128xf32, #tpu.memory_space<vmem>>, vector<1x128xf32>
    %cst_6 = arith.constant dense<0.000000e+00> : vector<128xf32>
    %7 = vector.multi_reduction <add>, %3, %cst_6 [0] : vector<128x128xf32> to vector<128xf32>
    %8 = vector.shape_cast %7 : vector<128xf32> to vector<1x128xf32>
    %9 = arith.addf %6, %8 : vector<1x128xf32>
    %c0_7 = arith.constant 0 : index
    %c0_8 = arith.constant 0 : index
    %10 = vector.load %arg7[%c0_7, %c0_8] : memref<1x128xf32, #tpu.memory_space<vmem>>, vector<1x128xf32>
    tpu.vector_store %arg7[%c0_7, %c0_8], %9 {strides = array<i32>} : memref<1x128xf32, #tpu.memory_space<vmem>>, vector<1x128xf32>,
    %c0_9 = arith.constant 0 : index
    %c0_10 = arith.constant 0 : index
    %11 = vector.load %arg8[%c0_9, %c0_10] : memref<1x128xf32, #tpu.memory_space<vmem>>, vector<1x128xf32>
    %12 = arith.mulf %3, %3 : vector<128x128xf32>
    %cst_11 = arith.constant dense<0.000000e+00> : vector<128xf32>
    %13 = vector.multi_reduction <add>, %12, %cst_11 [0] : vector<128x128xf32> to vector<128xf32>
    %14 = vector.shape_cast %13 : vector<128xf32> to vector<1x128xf32>
    %15 = arith.addf %11, %14 : vector<1x128xf32>
    %c0_12 = arith.constant 0 : index
    %c0_13 = arith.constant 0 : index
    %16 = vector.load %arg8[%c0_12, %c0_13] : memref<1x128xf32, #tpu.memory_space<vmem>>, vector<1x128xf32>
    tpu.vector_store %arg8[%c0_12, %c0_13], %15 {strides = array<i32>} : memref<1x128xf32, #tpu.memory_space<vmem>>, vector<1x128xf32>,
    %17 = arith.truncf %3 : vector<128x128xf32> to vector<128x128xbf16>
    %c0_14 = arith.constant 0 : index
    %c0_15 = arith.constant 0 : index
    %18 = vector.load %arg5[%c0_14, %c0_15] : memref<128x128xbf16, #tpu.memory_space<vmem>>, vector<128x128xbf16>
    tpu.vector_store %arg5[%c0_14, %c0_15], %17 {strides = array<i32>} : memref<128x128xbf16, #tpu.memory_space<vmem>>, vector<128x128xbf16>,
    %c0_16 = arith.constant 0 : index
    %c0_17 = arith.constant 0 : index
    %19 = vector.load %arg4[%c0_16, %c0_17] : memref<128x128xbf16, #tpu.memory_space<vmem>>, vector<128x128xbf16>
    %cst_18 = arith.constant dense<0.000000e+00> : vector<128x128xf32>
    %20 = tpu.matmul %1, %19, %cst_18 {dimension_numbers = #tpu.dot_dimension_numbers<[1], [0], [0], [1], [0, 0, 1, 1], [], []>} : vector<128x128xbf16>, vector<128x128xbf16>, vector<128x128xf32> -> vector<128x128xf32>
    %21 = arith.extui %0 : i1 to i32
    %c0_i32_19 = arith.constant 0 : i32
    %22 = arith.cmpi ne, %21, %c0_i32_19 : i32
    scf.if %22 {
      %cst_32 = arith.constant 0.000000e+00 : f32
      %36 = vector.broadcast %cst_32 : f32 to vector<1x128xf32>
      %c0_33 = arith.constant 0 : index
      %c0_34 = arith.constant 0 : index
      %37 = vector.load %arg9[%c0_33, %c0_34] : memref<1x128xf32, #tpu.memory_space<vmem>>, vector<1x128xf32>
      tpu.vector_store %arg9[%c0_33, %c0_34], %36 {strides = array<i32>} : memref<1x128xf32, #tpu.memory_space<vmem>>, vector<1x128xf32>,
      %cst_35 = arith.constant 0.000000e+00 : f32
      %38 = vector.broadcast %cst_35 : f32 to vector<1x128xf32>
      %c0_36 = arith.constant 0 : index
      %c0_37 = arith.constant 0 : index
      %39 = vector.load %arg10[%c0_36, %c0_37] : memref<1x128xf32, #tpu.memory_space<vmem>>, vector<1x128xf32>
      tpu.vector_store %arg10[%c0_36, %c0_37], %38 {strides = array<i32>} : memref<1x128xf32, #tpu.memory_space<vmem>>, vector<1x128xf32>,
    } else {
    }
    %c0_20 = arith.constant 0 : index
    %c0_21 = arith.constant 0 : index
    %23 = vector.load %arg9[%c0_20, %c0_21] : memref<1x128xf32, #tpu.memory_space<vmem>>, vector<1x128xf32>
    %cst_22 = arith.constant dense<0.000000e+00> : vector<128xf32>
    %24 = vector.multi_reduction <add>, %20, %cst_22 [0] : vector<128x128xf32> to vector<128xf32>
    %25 = vector.shape_cast %24 : vector<128xf32> to vector<1x128xf32>
    %26 = arith.addf %23, %25 : vector<1x128xf32>
    %c0_23 = arith.constant 0 : index
    %c0_24 = arith.constant 0 : index
    %27 = vector.load %arg9[%c0_23, %c0_24] : memref<1x128xf32, #tpu.memory_space<vmem>>, vector<1x128xf32>
    tpu.vector_store %arg9[%c0_23, %c0_24], %26 {strides = array<i32>} : memref<1x128xf32, #tpu.memory_space<vmem>>, vector<1x128xf32>,
    %c0_25 = arith.constant 0 : index
    %c0_26 = arith.constant 0 : index
    %28 = vector.load %arg10[%c0_25, %c0_26] : memref<1x128xf32, #tpu.memory_space<vmem>>, vector<1x128xf32>
    %29 = arith.mulf %20, %20 : vector<128x128xf32>
    %cst_27 = arith.constant dense<0.000000e+00> : vector<128xf32>
    %30 = vector.multi_reduction <add>, %29, %cst_27 [0] : vector<128x128xf32> to vector<128xf32>
    %31 = vector.shape_cast %30 : vector<128xf32> to vector<1x128xf32>
    %32 = arith.addf %28, %31 : vector<1x128xf32>
    %c0_28 = arith.constant 0 : index
    %c0_29 = arith.constant 0 : index
    %33 = vector.load %arg10[%c0_28, %c0_29] : memref<1x128xf32, #tpu.memory_space<vmem>>, vector<1x128xf32>
    tpu.vector_store %arg10[%c0_28, %c0_29], %32 {strides = array<i32>} : memref<1x128xf32, #tpu.memory_space<vmem>>, vector<1x128xf32>,
    %34 = arith.truncf %20 : vector<128x128xf32> to vector<128x128xbf16>
    %c0_30 = arith.constant 0 : index
    %c0_31 = arith.constant 0 : index
    %35 = vector.load %arg6[%c0_30, %c0_31] : memref<128x128xbf16, #tpu.memory_space<vmem>>, vector<128x128xbf16>
    tpu.vector_store %arg6[%c0_30, %c0_31], %34 {strides = array<i32>} : memref<128x128xbf16, #tpu.memory_space<vmem>>, vector<128x128xbf16>,
    return
  }
  func.func @transform_0(%arg0: i32, %arg1: i32) -> (i32, i32) {
    %c1_i32 = arith.constant 1 : i32
    %0 = arith.muli %arg0, %c1_i32 : i32
    %1 = arith.addi %0, %arg1 : i32
    %c0_i32 = arith.constant 0 : i32
    %c0_i32_0 = arith.constant 0 : i32
    return %1, %c0_i32 : i32, i32
  }
  func.func @transform_1(%arg0: i32, %arg1: i32) -> (i32, i32) {
    %c0_i32 = arith.constant 0 : i32
    %c0_i32_0 = arith.constant 0 : i32
    %c0_i32_1 = arith.constant 0 : i32
    return %c0_i32, %c0_i32_0 : i32, i32
  }
  func.func @transform_2(%arg0: i32, %arg1: i32) -> (i32, i32) {
    %c0_i32 = arith.constant 0 : i32
    %c0_i32_0 = arith.constant 0 : i32
    %c0_i32_1 = arith.constant 0 : i32
    return %c0_i32, %c0_i32_0 : i32, i32
  }
  func.func @transform_3(%arg0: i32, %arg1: i32) -> (i32, i32) {
    %c1_i32 = arith.constant 1 : i32
    %0 = arith.muli %arg0, %c1_i32 : i32
    %1 = arith.addi %0, %arg1 : i32
    %c0_i32 = arith.constant 0 : i32
    %c0_i32_0 = arith.constant 0 : i32
    return %1, %c0_i32 : i32, i32
  }
  func.func @transform_4(%arg0: i32, %arg1: i32) -> (i32, i32) {
    %c1_i32 = arith.constant 1 : i32
    %0 = arith.muli %arg0, %c1_i32 : i32
    %1 = arith.addi %0, %arg1 : i32
    %c0_i32 = arith.constant 0 : i32
    %c0_i32_0 = arith.constant 0 : i32
    return %1, %c0_i32 : i32, i32
  }
  func.func @transform_5(%arg0: i32, %arg1: i32) -> (i32, i32) {
    %c0_i32 = arith.constant 0 : i32
    %c0_i32_0 = arith.constant 0 : i32
    return %c0_i32, %arg0 : i32, i32
  }
  func.func @transform_6(%arg0: i32, %arg1: i32) -> (i32, i32) {
    %c0_i32 = arith.constant 0 : i32
    %c0_i32_0 = arith.constant 0 : i32
    return %c0_i32, %arg0 : i32, i32
  }
  func.func @transform_7(%arg0: i32, %arg1: i32) -> (i32, i32) {
    %c0_i32 = arith.constant 0 : i32
    %c0_i32_0 = arith.constant 0 : i32
    return %c0_i32, %arg0 : i32, i32
  }
  func.func @transform_8(%arg0: i32, %arg1: i32) -> (i32, i32) {
    %c0_i32 = arith.constant 0 : i32
    %c0_i32_0 = arith.constant 0 : i32
    return %c0_i32, %arg0 : i32, i32
  }
}

</mosaic_0001>

<llo_original>
// kernel: tpu_custom_call.1
$region0: #{tpu_custom_call.1}
  #allocation0 [shape = 'u32[]', space=smem, size = 0x4, offset = 0x4, fixed_abs, tag = 'smem constant byte address 0x4 - core index']
  #allocation1 [shape = 'u32[144,128]{1,0:T(1,128)}', space=vmem, size = 0x12000, scoped, tag = 'internal scratch']
  %s0 = inlined_call_operand.hbm [shape: bf16[128,128], index: 0, kind: input, shape index: {}]
  %s1 = inlined_call_operand.hbm [shape: bf16[128,128], index: 1, kind: input, shape index: {}]
  %s2 = inlined_call_operand.hbm [shape: bf16[128,128], index: 2, kind: input, shape index: {}]
  %s3 = inlined_call_operand.hbm [shape: bf16[128,128], index: 3, kind: output, shape index: {0}]
  %s4 = inlined_call_operand.hbm [shape: bf16[128,128], index: 4, kind: output, shape index: {1}]
  %s5 = inlined_call_operand.hbm [shape: f32[1,128], index: 5, kind: output, shape index: {2}]
  %s6 = inlined_call_operand.hbm [shape: f32[1,128], index: 6, kind: output, shape index: {3}]
  %s7 = inlined_call_operand.hbm [shape: f32[1,128], index: 7, kind: output, shape index: {4}]
  %s8 = inlined_call_operand.hbm [shape: f32[1,128], index: 8, kind: output, shape index: {5}]
  %9 = xla_tuple %s3, %s4, %s5, %s6, %s7, %s8
  %s10 = sld [smem:[#allocation0]]
  $region82: #{tpu_custom_call.1} parent=0
    _
  %s12 = ssub.s32 1, %s10
  %s13 = scalar_select 0, %s12, %s10
  $region1: #{tpu_custom_call.1} parent=0
    #allocation2 [shape = 'u8[32768]{0}', space=vmem, size = 0x8000, scoped, tag = 'input window, operand 0, single buffered']
    #allocation3 [shape = 's32[1]{0}', space=sflag, size = 0x4, scoped, tag = 'scoped memory for tpu_custom_call.1']
    #allocation4 [shape = 's32[1]{0}', space=sflag, size = 0x4, scoped, tag = 'scoped memory for tpu_custom_call.1']
    #allocation5 [shape = 'u8[32768]{0}', space=vmem, size = 0x8000, scoped, tag = 'input window, operand 1, single buffered']
    #allocation6 [shape = 's32[1]{0}', space=sflag, size = 0x4, scoped, tag = 'scoped memory for tpu_custom_call.1']
    #allocation7 [shape = 'u8[32768]{0}', space=vmem, size = 0x8000, scoped, tag = 'input window, operand 2, single buffered']
    #allocation8 [shape = 'u8[32768]{0}', space=vmem, size = 0x8000, scoped, tag = 'output window, operand 0, single buffered']
    #allocation9 [shape = 'u8[32768]{0}', space=vmem, size = 0x8000, scoped, tag = 'output window, operand 1, single buffered']
    #allocation10 [shape = 's32[1]{0}', space=sflag, size = 0x4, scoped, tag = 'scoped memory for tpu_custom_call.1']
    #allocation11 [shape = 'u8[512]{0}', space=vmem, size = 0x400, scoped, tag = 'output window, operand 2, single buffered']
    #allocation12 [shape = 'u8[512]{0}', space=vmem, size = 0x400, scoped, tag = 'output window, operand 3, single buffered']
    #allocation13 [shape = 's32[1]{0}', space=sflag, size = 0x4, scoped, tag = 'scoped memory for tpu_custom_call.1']
    #allocation14 [shape = 'u8[512]{0}', space=vmem, size = 0x400, scoped, tag = 'output window, operand 4, single buffered']
    #allocation15 [shape = 'u8[512]{0}', space=vmem, size = 0x400, scoped, tag = 'output window, operand 5, single buffered']
    #allocation16 [shape = 's32[1]{0}', space=sflag, size = 0x4, scoped, tag = 'scoped memory for tpu_custom_call.1']
    %14 = vsyncpa [#allocation3], 0
    %15 = vsyncpa [#allocation6], 0
    %16 = vsyncpa [#allocation4], 0
    %17 = vsyncpa [#allocation10], 0
    %18 = vsyncpa [#allocation13], 0
    %19 = vsyncpa [#allocation16], 0
    // Predicated region
    $region2: #{tpu_custom_call.1} parent=1 // pred_check
      _
    $region3: #{tpu_custom_call.1} parent=1 // pred_check_branch
      %21 = sbr.rel (0) target = $region5
    $region4: #{tpu_custom_call.1} parent=1 // pred_region
      %s22 = sadd.s32 0, 0
      %s23 = smul.u32 16, %s22
      %s25 = ssub.s32 1024, 1024
      %26 = vsyncadd [#allocation3], %s25
      %s27 = smul.addr %s23, 64
      %s28 = scalar_lea.hbm %s0, %s27
      %s29 = sshll.u32 [#allocation2], 4
      %s30 = int_to_ptr.vmem [resolvable:$true] %s29
      %35 = dma.hbm_to_vmem [thread:$0]  %s28, 1024, %s30, [#allocation3], 64, 64, 4
    $region5: #{tpu_custom_call.1} parent=1 // pred_fallthru
      _
    // Predicated region
    $region6: #{tpu_custom_call.1} parent=1 // pred_check
      _
    $region7: #{tpu_custom_call.1} parent=1 // pred_check_branch
      %37 = sbr.rel (0) target = $region9
    $region8: #{tpu_custom_call.1} parent=1 // pred_region
      %s39 = ssub.s32 1024, 1024
      %40 = vsyncadd [#allocation6], %s39
      %s41 = sshll.u32 [#allocation5], 4
      %s42 = int_to_ptr.vmem [resolvable:$true] %s41
      %47 = dma.hbm_to_vmem [thread:$0]  %s1, 1024, %s42, [#allocation6], 64, 64, 4
    $region9: #{tpu_custom_call.1} parent=1 // pred_fallthru
      _
    // Predicated region
    $region10: #{tpu_custom_call.1} parent=1 // pred_check
      _
    $region11: #{tpu_custom_call.1} parent=1 // pred_check_branch
      %49 = sbr.rel (0) target = $region13
    $region12: #{tpu_custom_call.1} parent=1 // pred_region
      %s51 = ssub.s32 1024, 1024
      %52 = vsyncadd [#allocation6], %s51
      %s53 = sshll.u32 [#allocation7], 4
      %s54 = int_to_ptr.vmem [resolvable:$true] %s53
      %59 = dma.hbm_to_vmem [thread:$0]  %s2, 1024, %s54, [#allocation6], 64, 64, 4
    $region13: #{tpu_custom_call.1} parent=1 // pred_fallthru
      _
    // Predicated region
    $region14: #{tpu_custom_call.1} parent=1 // pred_check
      _
    $region15: #{tpu_custom_call.1} parent=1 // pred_check_branch
      %61 = sbr.rel (0) target = $region17
    $region16: #{tpu_custom_call.1} parent=1 // pred_region
      %62 = dma.done [#allocation3], 1024
    $region17: #{tpu_custom_call.1} parent=1 // pred_fallthru
      _
    // Predicated region
    $region18: #{tpu_custom_call.1} parent=1 // pred_check
      _
    $region19: #{tpu_custom_call.1} parent=1 // pred_check_branch
      %64 = sbr.rel (0) target = $region21
    $region20: #{tpu_custom_call.1} parent=1 // pred_region
      %65 = dma.done [#allocation6], 1024
    $region21: #{tpu_custom_call.1} parent=1 // pred_fallthru
      _
    // Predicated region
    $region22: #{tpu_custom_call.1} parent=1 // pred_check
      _
    $region23: #{tpu_custom_call.1} parent=1 // pred_check_branch
      %67 = sbr.rel (0) target = $region25
    $region24: #{tpu_custom_call.1} parent=1 // pred_region
      %68 = dma.done [#allocation6], 1024
    $region25: #{tpu_custom_call.1} parent=1 // pred_fallthru
      _
    %s69 = sadd.s32 0, 0
    %s70 = smul.u32 16, %s69
    %s71 = sadd.s32 0, 0
    %s72 = smul.u32 16, %s71
    %s73 = sadd.s32 0, 0
    %s74 = smul.u32 16, %s73
    %p76 = scmp.eq.s32.totalorder 0, 0
    %v77 = vld [vmem:[#allocation2] sm:$0xf]
    %v78 = vld [vmem:[#allocation2 + $0x4] sm:$0xf]
    %v79 = vld [vmem:[#allocation2 + $0x8] sm:$0xf]
    %v80 = vld [vmem:[#allocation2 + $0xc] sm:$0xf]
    %v81 = vld [vmem:[#allocation2 + $0x10] sm:$0xf]
    %v82 = vld [vmem:[#allocation2 + $0x14] sm:$0xf]
    %v83 = vld [vmem:[#allocation2 + $0x18] sm:$0xf]
    %v84 = vld [vmem:[#allocation2 + $0x1c] sm:$0xf]
    %v85 = vld [vmem:[#allocation2 + $0x20] sm:$0xf]
    %v86 = vld [vmem:[#allocation2 + $0x24] sm:$0xf]
    %v87 = vld [vmem:[#allocation2 + $0x28] sm:$0xf]
    %v88 = vld [vmem:[#allocation2 + $0x2c] sm:$0xf]
    %v89 = vld [vmem:[#allocation2 + $0x30] sm:$0xf]
    %v90 = vld [vmem:[#allocation2 + $0x34] sm:$0xf]
    %v91 = vld [vmem:[#allocation2 + $0x38] sm:$0xf]
    %v92 = vld [vmem:[#allocation2 + $0x3c] sm:$0xf]
    %v93 = vld [vmem:[#allocation5] sm:$0xf]
    %v94 = vld [vmem:[#allocation5 + $0x4] sm:$0xf]
    %v95 = vld [vmem:[#allocation5 + $0x8] sm:$0xf]
    %v96 = vld [vmem:[#allocation5 + $0xc] sm:$0xf]
    %v97 = vld [vmem:[#allocation5 + $0x10] sm:$0xf]
    %v98 = vld [vmem:[#allocation5 + $0x14] sm:$0xf]
    %v99 = vld [vmem:[#allocation5 + $0x18] sm:$0xf]
    %v100 = vld [vmem:[#allocation5 + $0x1c] sm:$0xf]
    %v101 = vld [vmem:[#allocation5 + $0x20] sm:$0xf]
    %v102 = vld [vmem:[#allocation5 + $0x24] sm:$0xf]
    %v103 = vld [vmem:[#allocation5 + $0x28] sm:$0xf]
    %v104 = vld [vmem:[#allocation5 + $0x2c] sm:$0xf]
    %v105 = vld [vmem:[#allocation5 + $0x30] sm:$0xf]
    %v106 = vld [vmem:[#allocation5 + $0x34] sm:$0xf]
    %v107 = vld [vmem:[#allocation5 + $0x38] sm:$0xf]
    %v108 = vld [vmem:[#allocation5 + $0x3c] sm:$0xf]
    %v125 = vunpack.c.l.b16 %v77
    %v126 = vunpack.c.l.b16 %v78
    %v127 = vunpack.c.l.b16 %v79
    %v128 = vunpack.c.l.b16 %v80
    %v129 = vunpack.c.l.b16 %v81
    %v130 = vunpack.c.l.b16 %v82
    %v131 = vunpack.c.l.b16 %v83
    %v132 = vunpack.c.l.b16 %v84
    %v133 = vunpack.c.l.b16 %v85
    %v134 = vunpack.c.l.b16 %v86
    %v135 = vunpack.c.l.b16 %v87
    %v136 = vunpack.c.l.b16 %v88
    %v137 = vunpack.c.l.b16 %v89
    %v138 = vunpack.c.l.b16 %v90
    %v139 = vunpack.c.l.b16 %v91
    %v140 = vunpack.c.l.b16 %v92
    %v141 = vpack.c.b16 %v126, %v125
    %v142 = vpack.c.b16 %v128, %v127
    %v143 = vpack.c.b16 %v130, %v129
    %v144 = vpack.c.b16 %v132, %v131
    %v145 = vpack.c.b16 %v134, %v133
    %v146 = vpack.c.b16 %v136, %v135
    %v147 = vpack.c.b16 %v138, %v137
    %v148 = vpack.c.b16 %v140, %v139
    %v173 = vunpack.c.l.b16 %v93
    %v174 = vunpack.c.l.b16 %v94
    %v175 = vunpack.c.l.b16 %v95
    %v176 = vunpack.c.l.b16 %v96
    %v177 = vunpack.c.l.b16 %v97
    %v178 = vunpack.c.l.b16 %v98
    %v179 = vunpack.c.l.b16 %v99
    %v180 = vunpack.c.l.b16 %v100
    %v181 = vunpack.c.l.b16 %v101
    %v182 = vunpack.c.l.b16 %v102
    %v183 = vunpack.c.l.b16 %v103
    %v184 = vunpack.c.l.b16 %v104
    %v185 = vunpack.c.l.b16 %v105
    %v186 = vunpack.c.l.b16 %v106
    %v187 = vunpack.c.l.b16 %v107
    %v188 = vunpack.c.l.b16 %v108
    %v189 = vpack.c.b16 %v174, %v173
    %v190 = vpack.c.b16 %v176, %v175
    %v191 = vpack.c.b16 %v178, %v177
    %v192 = vpack.c.b16 %v180, %v179
    %v193 = vpack.c.b16 %v182, %v181
    %v194 = vpack.c.b16 %v184, %v183
    %v195 = vpack.c.b16 %v186, %v185
    %v196 = vpack.c.b16 %v188, %v187
    %205 = vmatprep.subr.bf16.mxu0 0
    %206 = vmatpush1.bf16.msra.mxu0 %v196
    %207 = vmatprep.subr.bf16.mxu0 0
    %208 = vmatpush1.bf16.msra.mxu0 %v195
    %209 = vmatprep.subr.bf16.mxu0 0
    %210 = vmatpush1.bf16.msra.mxu0 %v194
    %211 = vmatprep.subr.bf16.mxu0 0
    %212 = vmatpush1.bf16.msra.mxu0 %v193
    %213 = vmatprep.subr.bf16.mxu0 0
    %214 = vmatpush1.bf16.msra.mxu0 %v192
    %215 = vmatprep.subr.bf16.mxu0 0
    %216 = vmatpush1.bf16.msra.mxu0 %v191
    %217 = vmatprep.subr.bf16.mxu0 0
    %218 = vmatpush1.bf16.msra.mxu0 %v190
    %219 = vmatprep.subr.bf16.mxu0 0
    %220 = vmatpush1.bf16.msra.mxu0 %v189
    %221 = vmatprep.subr.bf16.mxu0 0
    %222 = vmatpush2.bf16.msra.mxu0 0
    %223 = vmatprep.subr.bf16.mxu0 0
    %224 = vmatpush2.bf16.msra.mxu0 0
    %225 = vmatprep.subr.bf16.mxu0 0
    %226 = vmatpush2.bf16.msra.mxu0 0
    %227 = vmatprep.subr.bf16.mxu0 0
    %228 = vmatpush2.bf16.msra.mxu0 0
    %229 = vmatprep.subr.bf16.mxu0 0
    %230 = vmatpush2.bf16.msra.mxu0 0
    %231 = vmatprep.subr.bf16.mxu0 0
    %232 = vmatpush2.bf16.msra.mxu0 0
    %233 = vmatprep.subr.bf16.mxu0 0
    %234 = vmatpush2.bf16.msra.mxu0 0
    %235 = vmatprep.subr.bf16.mxu0 0
    %236 = vmatpush2.bf16.msra.mxu0 0
    %237 = vmatprep.mubr.bf16.mxu0 0
    %238 = vmatmul.mubr.bf16.gmra.mxu0 %v141
    %v239 = vpop.f32.mrf.mxu0
    %v240 = vadd.f32 0.0, %v239
    %v241 = vpop.f32.mrf.mxu0
    %v242 = vpop.f32.mrf.mxu0
    %v243 = vadd.f32 0.0, %v242
    %v244 = vpop.f32.mrf.mxu0
    %245 = vmatprep.mubr.bf16.mxu0 0
    %246 = vmatmul.mubr.bf16.gmra.mxu0 %v142
    %v247 = vpop.f32.mrf.mxu0
    %v248 = vadd.f32 0.0, %v247
    %v249 = vpop.f32.mrf.mxu0
    %v250 = vpop.f32.mrf.mxu0
    %v251 = vadd.f32 0.0, %v250
    %v252 = vpop.f32.mrf.mxu0
    %253 = vmatprep.mubr.bf16.mxu0 0
    %254 = vmatmul.mubr.bf16.gmra.mxu0 %v143
    %v255 = vpop.f32.mrf.mxu0
    %v256 = vadd.f32 0.0, %v255
    %v257 = vpop.f32.mrf.mxu0
    %v258 = vpop.f32.mrf.mxu0
    %v259 = vadd.f32 0.0, %v258
    %v260 = vpop.f32.mrf.mxu0
    %261 = vmatprep.mubr.bf16.mxu0 0
    %262 = vmatmul.mubr.bf16.gmra.mxu0 %v144
    %v263 = vpop.f32.mrf.mxu0
    %v264 = vadd.f32 0.0, %v263
    %v265 = vpop.f32.mrf.mxu0
    %v266 = vpop.f32.mrf.mxu0
    %v267 = vadd.f32 0.0, %v266
    %v268 = vpop.f32.mrf.mxu0
    %269 = vmatprep.mubr.bf16.mxu0 0
    %270 = vmatmul.mubr.bf16.gmra.mxu0 %v145
    %v271 = vpop.f32.mrf.mxu0
    %v272 = vadd.f32 0.0, %v271
    %v273 = vpop.f32.mrf.mxu0
    %v274 = vpop.f32.mrf.mxu0
    %v275 = vadd.f32 0.0, %v274
    %v276 = vpop.f32.mrf.mxu0
    %277 = vmatprep.mubr.bf16.mxu0 0
    %278 = vmatmul.mubr.bf16.gmra.mxu0 %v146
    %v279 = vpop.f32.mrf.mxu0
    %v280 = vadd.f32 0.0, %v279
    %v281 = vpop.f32.mrf.mxu0
    %v282 = vpop.f32.mrf.mxu0
    %v283 = vadd.f32 0.0, %v282
    %v284 = vpop.f32.mrf.mxu0
    %285 = vmatprep.mubr.bf16.mxu0 0
    %286 = vmatmul.mubr.bf16.gmra.mxu0 %v147
    %v287 = vpop.f32.mrf.mxu0
    %v288 = vadd.f32 0.0, %v287
    %v289 = vpop.f32.mrf.mxu0
    %v290 = vpop.f32.mrf.mxu0
    %v291 = vadd.f32 0.0, %v290
    %v292 = vpop.f32.mrf.mxu0
    %293 = vmatprep.mubr.bf16.mxu0 0
    %294 = vmatmul.mubr.bf16.gmra.mxu0 %v148
    %v295 = vpop.f32.mrf.mxu0
    %v296 = vadd.f32 0.0, %v295
    %v297 = vpop.f32.mrf.mxu0
    %v298 = vpop.f32.mrf.mxu0
    %v299 = vadd.f32 0.0, %v298
    %v300 = vpop.f32.mrf.mxu0
    %301 = vdwg.mxu0
    // Predicated region
    $region26: #{tpu_custom_call.1} parent=1 // pred_check
      %p302 = pneg %p76
    $region27: #{tpu_custom_call.1} parent=1 // pred_check_branch
      %304 = sbr.rel (%p302) target = $region29
    $region28: #{tpu_custom_call.1} parent=1 // pred_region
      %305 = vst [vmem:[#allocation11] sm:$0x1] 0.0
      %306 = vst [vmem:[#allocation12] sm:$0x1] 0.0
    $region29: #{tpu_custom_call.1} parent=1 // pred_fallthru
      _
    %v307 = vld [vmem:[#allocation11] sm:$0x1]
    %v308 = vadd.f32 %v240, %v243
    %v309 = vadd.f32 %v308, %v248
    %v310 = vadd.f32 %v309, %v251
    %v311 = vadd.f32 %v310, %v256
    %v312 = vadd.f32 %v311, %v259
    %v313 = vadd.f32 %v312, %v264
    %v314 = vadd.f32 %v313, %v267
    %v315 = vadd.f32 %v314, %v272
    %v316 = vadd.f32 %v315, %v275
    %v317 = vadd.f32 %v316, %v280
    %v318 = vadd.f32 %v317, %v283
    %v319 = vadd.f32 %v318, %v288
    %v320 = vadd.f32 %v319, %v291
    %v321 = vadd.f32 %v320, %v296
    %v322 = vadd.f32 %v321, %v299
    %v323 = vrot.slane %v322, 4
    %v324 = vadd.f32 %v322, %v323
    %v325 = vrot.slane %v324, 2
    %v326 = vadd.f32 %v324, %v325
    %v327 = vrot.slane %v326, 1
    %v328 = vadd.f32 %v326, %v327
    %v329 = vadd.f32 %v307, %v328
    %330 = vst [vmem:[#allocation11] sm:$0x1] %v329
    %v331 = vld [vmem:[#allocation12] sm:$0x1]
    %v332 = vmul.f32 %v240, %v240
    %v333 = vmul.f32 %v243, %v243
    %v334 = vmul.f32 %v248, %v248
    %v335 = vmul.f32 %v251, %v251
    %v336 = vmul.f32 %v256, %v256
    %v337 = vmul.f32 %v259, %v259
    %v338 = vmul.f32 %v264, %v264
    %v339 = vmul.f32 %v267, %v267
    %v340 = vmul.f32 %v272, %v272
    %v341 = vmul.f32 %v275, %v275
    %v342 = vmul.f32 %v280, %v280
    %v343 = vmul.f32 %v283, %v283
    %v344 = vmul.f32 %v288, %v288
    %v345 = vmul.f32 %v291, %v291
    %v346 = vmul.f32 %v296, %v296
    %v347 = vmul.f32 %v299, %v299
    %v348 = vadd.f32 %v332, %v333
    %v349 = vadd.f32 %v348, %v334
    %v350 = vadd.f32 %v349, %v335
    %v351 = vadd.f32 %v350, %v336
    %v352 = vadd.f32 %v351, %v337
    %v353 = vadd.f32 %v352, %v338
    %v354 = vadd.f32 %v353, %v339
    %v355 = vadd.f32 %v354, %v340
    %v356 = vadd.f32 %v355, %v341
    %v357 = vadd.f32 %v356, %v342
    %v358 = vadd.f32 %v357, %v343
    %v359 = vadd.f32 %v358, %v344
    %v360 = vadd.f32 %v359, %v345
    %v361 = vadd.f32 %v360, %v346
    %v362 = vadd.f32 %v361, %v347
    %v363 = vrot.slane %v362, 4
    %v364 = vadd.f32 %v362, %v363
    %v365 = vrot.slane %v364, 2
    %v366 = vadd.f32 %v364, %v365
    %v367 = vrot.slane %v366, 1
    %v368 = vadd.f32 %v366, %v367
    %v369 = vadd.f32 %v331, %v368
    %370 = vst [vmem:[#allocation12] sm:$0x1] %v369
    %v371 = vpack.c.bf16 %v243, %v240
    %v372 = vpack.c.bf16 %v251, %v248
    %v373 = vpack.c.bf16 %v259, %v256
    %v374 = vpack.c.bf16 %v267, %v264
    %v375 = vpack.c.bf16 %v275, %v272
    %v376 = vpack.c.bf16 %v283, %v280
    %v377 = vpack.c.bf16 %v291, %v288
    %v378 = vpack.c.bf16 %v299, %v296
    %v387 = vunpack.c.l.b16 %v371
    %v388 = vunpack.c.h.b16 %v371
    %v389 = vunpack.c.l.b16 %v372
    %v390 = vunpack.c.h.b16 %v372
    %v391 = vunpack.c.l.b16 %v373
    %v392 = vunpack.c.h.b16 %v373
    %v393 = vunpack.c.l.b16 %v374
    %v394 = vunpack.c.h.b16 %v374
    %v395 = vunpack.c.l.b16 %v375
    %v396 = vunpack.c.h.b16 %v375
    %v397 = vunpack.c.l.b16 %v376
    %v398 = vunpack.c.h.b16 %v376
    %v399 = vunpack.c.l.b16 %v377
    %v400 = vunpack.c.h.b16 %v377
    %v401 = vunpack.c.l.b16 %v378
    %v402 = vunpack.c.h.b16 %v378
    %v403 = vpack.c.b16 %v387, %v387
    %v404 = vpack.c.b16 %v388, %v388
    %v405 = vpack.c.b16 %v389, %v389
    %v406 = vpack.c.b16 %v390, %v390
    %v407 = vpack.c.b16 %v391, %v391
    %v408 = vpack.c.b16 %v392, %v392
    %v409 = vpack.c.b16 %v393, %v393
    %v410 = vpack.c.b16 %v394, %v394
    %v411 = vpack.c.b16 %v395, %v395
    %v412 = vpack.c.b16 %v396, %v396
    %v413 = vpack.c.b16 %v397, %v397
    %v414 = vpack.c.b16 %v398, %v398
    %v415 = vpack.c.b16 %v399, %v399
    %v416 = vpack.c.b16 %v400, %v400
    %v417 = vpack.c.b16 %v401, %v401
    %v418 = vpack.c.b16 %v402, %v402
    %435 = vst [vmem:[#allocation8] sm:$0xf] %v403
    %436 = vst [vmem:[#allocation8 + $0x4] sm:$0xf] %v404
    %437 = vst [vmem:[#allocation8 + $0x8] sm:$0xf] %v405
    %438 = vst [vmem:[#allocation8 + $0xc] sm:$0xf] %v406
    %439 = vst [vmem:[#allocation8 + $0x10] sm:$0xf] %v407
    %440 = vst [vmem:[#allocation8 + $0x14] sm:$0xf] %v408
    %441 = vst [vmem:[#allocation8 + $0x18] sm:$0xf] %v409
    %442 = vst [vmem:[#allocation8 + $0x1c] sm:$0xf] %v410
    %443 = vst [vmem:[#allocation8 + $0x20] sm:$0xf] %v411
    %444 = vst [vmem:[#allocation8 + $0x24] sm:$0xf] %v412
    %445 = vst [vmem:[#allocation8 + $0x28] sm:$0xf] %v413
    %446 = vst [vmem:[#allocation8 + $0x2c] sm:$0xf] %v414
    %447 = vst [vmem:[#allocation8 + $0x30] sm:$0xf] %v415
    %448 = vst [vmem:[#allocation8 + $0x34] sm:$0xf] %v416
    %449 = vst [vmem:[#allocation8 + $0x38] sm:$0xf] %v417
    %450 = vst [vmem:[#allocation8 + $0x3c] sm:$0xf] %v418
    %v451 = vld [vmem:[#allocation7] sm:$0xf]
    %v452 = vld [vmem:[#allocation7 + $0x4] sm:$0xf]
    %v453 = vld [vmem:[#allocation7 + $0x8] sm:$0xf]
    %v454 = vld [vmem:[#allocation7 + $0xc] sm:$0xf]
    %v455 = vld [vmem:[#allocation7 + $0x10] sm:$0xf]
    %v456 = vld [vmem:[#allocation7 + $0x14] sm:$0xf]
    %v457 = vld [vmem:[#allocation7 + $0x18] sm:$0xf]
    %v458 = vld [vmem:[#allocation7 + $0x1c] sm:$0xf]
    %v459 = vld [vmem:[#allocation7 + $0x20] sm:$0xf]
    %v460 = vld [vmem:[#allocation7 + $0x24] sm:$0xf]
    %v461 = vld [vmem:[#allocation7 + $0x28] sm:$0xf]
    %v462 = vld [vmem:[#allocation7 + $0x2c] sm:$0xf]
    %v463 = vld [vmem:[#allocation7 + $0x30] sm:$0xf]
    %v464 = vld [vmem:[#allocation7 + $0x34] sm:$0xf]
    %v465 = vld [vmem:[#allocation7 + $0x38] sm:$0xf]
    %v466 = vld [vmem:[#allocation7 + $0x3c] sm:$0xf]
    %v483 = vunpack.c.l.b16 %v451
    %v484 = vunpack.c.l.b16 %v452
    %v485 = vunpack.c.l.b16 %v453
    %v486 = vunpack.c.l.b16 %v454
    %v487 = vunpack.c.l.b16 %v455
    %v488 = vunpack.c.l.b16 %v456
    %v489 = vunpack.c.l.b16 %v457
    %v490 = vunpack.c.l.b16 %v458
    %v491 = vunpack.c.l.b16 %v459
    %v492 = vunpack.c.l.b16 %v460
    %v493 = vunpack.c.l.b16 %v461
    %v494 = vunpack.c.l.b16 %v462
    %v495 = vunpack.c.l.b16 %v463
    %v496 = vunpack.c.l.b16 %v464
    %v497 = vunpack.c.l.b16 %v465
    %v498 = vunpack.c.l.b16 %v466
    %v499 = vpack.c.b16 %v484, %v483
    %v500 = vpack.c.b16 %v486, %v485
    %v501 = vpack.c.b16 %v488, %v487
    %v502 = vpack.c.b16 %v490, %v489
    %v503 = vpack.c.b16 %v492, %v491
    %v504 = vpack.c.b16 %v494, %v493
    %v505 = vpack.c.b16 %v496, %v495
    %v506 = vpack.c.b16 %v498, %v497
    %515 = vmatprep.subr.bf16.mxu0 0
    %516 = vmatpush1.bf16.msra.mxu0 %v506
    %517 = vmatprep.subr.bf16.mxu0 0
    %518 = vmatpush1.bf16.msra.mxu0 %v505
    %519 = vmatprep.subr.bf16.mxu0 0
    %520 = vmatpush1.bf16.msra.mxu0 %v504
    %521 = vmatprep.subr.bf16.mxu0 0
    %522 = vmatpush1.bf16.msra.mxu0 %v503
    %523 = vmatprep.subr.bf16.mxu0 0
    %524 = vmatpush1.bf16.msra.mxu0 %v502
    %525 = vmatprep.subr.bf16.mxu0 0
    %526 = vmatpush1.bf16.msra.mxu0 %v501
    %527 = vmatprep.subr.bf16.mxu0 0
    %528 = vmatpush1.bf16.msra.mxu0 %v500
    %529 = vmatprep.subr.bf16.mxu0 0
    %530 = vmatpush1.bf16.msra.mxu0 %v499
    %531 = vmatprep.subr.bf16.mxu0 0
    %532 = vmatpush2.bf16.msra.mxu0 0
    %533 = vmatprep.subr.bf16.mxu0 0
    %534 = vmatpush2.bf16.msra.mxu0 0
    %535 = vmatprep.subr.bf16.mxu0 0
    %536 = vmatpush2.bf16.msra.mxu0 0
    %537 = vmatprep.subr.bf16.mxu0 0
    %538 = vmatpush2.bf16.msra.mxu0 0
    %539 = vmatprep.subr.bf16.mxu0 0
    %540 = vmatpush2.bf16.msra.mxu0 0
    %541 = vmatprep.subr.bf16.mxu0 0
    %542 = vmatpush2.bf16.msra.mxu0 0
    %543 = vmatprep.subr.bf16.mxu0 0
    %544 = vmatpush2.bf16.msra.mxu0 0
    %545 = vmatprep.subr.bf16.mxu0 0
    %546 = vmatpush2.bf16.msra.mxu0 0
    %547 = vmatprep.mubr.bf16.mxu0 0
    %548 = vmatmul.mubr.bf16.gmra.mxu0 %v141
    %v549 = vpop.f32.mrf.mxu0
    %v550 = vadd.f32 0.0, %v549
    %v551 = vpop.f32.mrf.mxu0
    %v552 = vpop.f32.mrf.mxu0
    %v553 = vadd.f32 0.0, %v552
    %v554 = vpop.f32.mrf.mxu0
    %555 = vmatprep.mubr.bf16.mxu0 0
    %556 = vmatmul.mubr.bf16.gmra.mxu0 %v142
    %v557 = vpop.f32.mrf.mxu0
    %v558 = vadd.f32 0.0, %v557
    %v559 = vpop.f32.mrf.mxu0
    %v560 = vpop.f32.mrf.mxu0
    %v561 = vadd.f32 0.0, %v560
    %v562 = vpop.f32.mrf.mxu0
    %563 = vmatprep.mubr.bf16.mxu0 0
    %564 = vmatmul.mubr.bf16.gmra.mxu0 %v143
    %v565 = vpop.f32.mrf.mxu0
    %v566 = vadd.f32 0.0, %v565
    %v567 = vpop.f32.mrf.mxu0
    %v568 = vpop.f32.mrf.mxu0
    %v569 = vadd.f32 0.0, %v568
    %v570 = vpop.f32.mrf.mxu0
    %571 = vmatprep.mubr.bf16.mxu0 0
    %572 = vmatmul.mubr.bf16.gmra.mxu0 %v144
    %v573 = vpop.f32.mrf.mxu0
    %v574 = vadd.f32 0.0, %v573
    %v575 = vpop.f32.mrf.mxu0
    %v576 = vpop.f32.mrf.mxu0
    %v577 = vadd.f32 0.0, %v576
    %v578 = vpop.f32.mrf.mxu0
    %579 = vmatprep.mubr.bf16.mxu0 0
    %580 = vmatmul.mubr.bf16.gmra.mxu0 %v145
    %v581 = vpop.f32.mrf.mxu0
    %v582 = vadd.f32 0.0, %v581
    %v583 = vpop.f32.mrf.mxu0
    %v584 = vpop.f32.mrf.mxu0
    %v585 = vadd.f32 0.0, %v584
    %v586 = vpop.f32.mrf.mxu0
    %587 = vmatprep.mubr.bf16.mxu0 0
    %588 = vmatmul.mubr.bf16.gmra.mxu0 %v146
    %v589 = vpop.f32.mrf.mxu0
    %v590 = vadd.f32 0.0, %v589
    %v591 = vpop.f32.mrf.mxu0
    %v592 = vpop.f32.mrf.mxu0
    %v593 = vadd.f32 0.0, %v592
    %v594 = vpop.f32.mrf.mxu0
    %595 = vmatprep.mubr.bf16.mxu0 0
    %596 = vmatmul.mubr.bf16.gmra.mxu0 %v147
    %v597 = vpop.f32.mrf.mxu0
    %v598 = vadd.f32 0.0, %v597
    %v599 = vpop.f32.mrf.mxu0
    %v600 = vpop.f32.mrf.mxu0
    %v601 = vadd.f32 0.0, %v600
    %v602 = vpop.f32.mrf.mxu0
    %603 = vmatprep.mubr.bf16.mxu0 0
    %604 = vmatmul.mubr.bf16.gmra.mxu0 %v148
    %v605 = vpop.f32.mrf.mxu0
    %v606 = vadd.f32 0.0, %v605
    %v607 = vpop.f32.mrf.mxu0
    %v608 = vpop.f32.mrf.mxu0
    %v609 = vadd.f32 0.0, %v608
    %v610 = vpop.f32.mrf.mxu0
    %611 = vdwg.mxu0
    // Predicated region
    $region30: #{tpu_custom_call.1} parent=1 // pred_check
      %p612 = pneg %p76
    $region31: #{tpu_custom_call.1} parent=1 // pred_check_branch
      %614 = sbr.rel (%p612) target = $region33
    $region32: #{tpu_custom_call.1} parent=1 // pred_region
      %615 = vst [vmem:[#allocation14] sm:$0x1] 0.0
      %616 = vst [vmem:[#allocation15] sm:$0x1] 0.0
    $region33: #{tpu_custom_call.1} parent=1 // pred_fallthru
      _
    %v617 = vld [vmem:[#allocation14] sm:$0x1]
    %v618 = vadd.f32 %v550, %v553
    %v619 = vadd.f32 %v618, %v558
    %v620 = vadd.f32 %v619, %v561
    %v621 = vadd.f32 %v620, %v566
    %v622 = vadd.f32 %v621, %v569
    %v623 = vadd.f32 %v622, %v574
    %v624 = vadd.f32 %v623, %v577
    %v625 = vadd.f32 %v624, %v582
    %v626 = vadd.f32 %v625, %v585
    %v627 = vadd.f32 %v626, %v590
    %v628 = vadd.f32 %v627, %v593
    %v629 = vadd.f32 %v628, %v598
    %v630 = vadd.f32 %v629, %v601
    %v631 = vadd.f32 %v630, %v606
    %v632 = vadd.f32 %v631, %v609
    %v633 = vrot.slane %v632, 4
    %v634 = vadd.f32 %v632, %v633
    %v635 = vrot.slane %v634, 2
    %v636 = vadd.f32 %v634, %v635
    %v637 = vrot.slane %v636, 1
    %v638 = vadd.f32 %v636, %v637
    %v639 = vadd.f32 %v617, %v638
    %640 = vst [vmem:[#allocation14] sm:$0x1] %v639
    %v641 = vld [vmem:[#allocation15] sm:$0x1]
    %v642 = vmul.f32 %v550, %v550
    %v643 = vmul.f32 %v553, %v553
    %v644 = vmul.f32 %v558, %v558
    %v645 = vmul.f32 %v561, %v561
    %v646 = vmul.f32 %v566, %v566
    %v647 = vmul.f32 %v569, %v569
    %v648 = vmul.f32 %v574, %v574
    %v649 = vmul.f32 %v577, %v577
    %v650 = vmul.f32 %v582, %v582
    %v651 = vmul.f32 %v585, %v585
    %v652 = vmul.f32 %v590, %v590
    %v653 = vmul.f32 %v593, %v593
    %v654 = vmul.f32 %v598, %v598
    %v655 = vmul.f32 %v601, %v601
    %v656 = vmul.f32 %v606, %v606
    %v657 = vmul.f32 %v609, %v609
    %v658 = vadd.f32 %v642, %v643
    %v659 = vadd.f32 %v658, %v644
    %v660 = vadd.f32 %v659, %v645
    %v661 = vadd.f32 %v660, %v646
    %v662 = vadd.f32 %v661, %v647
    %v663 = vadd.f32 %v662, %v648
    %v664 = vadd.f32 %v663, %v649
    %v665 = vadd.f32 %v664, %v650
    %v666 = vadd.f32 %v665, %v651
    %v667 = vadd.f32 %v666, %v652
    %v668 = vadd.f32 %v667, %v653
    %v669 = vadd.f32 %v668, %v654
    %v670 = vadd.f32 %v669, %v655
    %v671 = vadd.f32 %v670, %v656
    %v672 = vadd.f32 %v671, %v657
    %v673 = vrot.slane %v672, 4
    %v674 = vadd.f32 %v672, %v673
    %v675 = vrot.slane %v674, 2
    %v676 = vadd.f32 %v674, %v675
    %v677 = vrot.slane %v676, 1
    %v678 = vadd.f32 %v676, %v677
    %v679 = vadd.f32 %v641, %v678
    %680 = vst [vmem:[#allocation15] sm:$0x1] %v679
    %v681 = vpack.c.bf16 %v553, %v550
    %v682 = vpack.c.bf16 %v561, %v558
    %v683 = vpack.c.bf16 %v569, %v566
    %v684 = vpack.c.bf16 %v577, %v574
    %v685 = vpack.c.bf16 %v585, %v582
    %v686 = vpack.c.bf16 %v593, %v590
    %v687 = vpack.c.bf16 %v601, %v598
    %v688 = vpack.c.bf16 %v609, %v606
    %v697 = vunpack.c.l.b16 %v681
    %v698 = vunpack.c.h.b16 %v681
    %v699 = vunpack.c.l.b16 %v682
    %v700 = vunpack.c.h.b16 %v682
    %v701 = vunpack.c.l.b16 %v683
    %v702 = vunpack.c.h.b16 %v683
    %v703 = vunpack.c.l.b16 %v684
    %v704 = vunpack.c.h.b16 %v684
    %v705 = vunpack.c.l.b16 %v685
    %v706 = vunpack.c.h.b16 %v685
    %v707 = vunpack.c.l.b16 %v686
    %v708 = vunpack.c.h.b16 %v686
    %v709 = vunpack.c.l.b16 %v687
    %v710 = vunpack.c.h.b16 %v687
    %v711 = vunpack.c.l.b16 %v688
    %v712 = vunpack.c.h.b16 %v688
    %v713 = vpack.c.b16 %v697, %v697
    %v714 = vpack.c.b16 %v698, %v698
    %v715 = vpack.c.b16 %v699, %v699
    %v716 = vpack.c.b16 %v700, %v700
    %v717 = vpack.c.b16 %v701, %v701
    %v718 = vpack.c.b16 %v702, %v702
    %v719 = vpack.c.b16 %v703, %v703
    %v720 = vpack.c.b16 %v704, %v704
    %v721 = vpack.c.b16 %v705, %v705
    %v722 = vpack.c.b16 %v706, %v706
    %v723 = vpack.c.b16 %v707, %v707
    %v724 = vpack.c.b16 %v708, %v708
    %v725 = vpack.c.b16 %v709, %v709
    %v726 = vpack.c.b16 %v710, %v710
    %v727 = vpack.c.b16 %v711, %v711
    %v728 = vpack.c.b16 %v712, %v712
    %745 = vst [vmem:[#allocation9] sm:$0xf] %v713
    %746 = vst [vmem:[#allocation9 + $0x4] sm:$0xf] %v714
    %747 = vst [vmem:[#allocation9 + $0x8] sm:$0xf] %v715
    %748 = vst [vmem:[#allocation9 + $0xc] sm:$0xf] %v716
    %749 = vst [vmem:[#allocation9 + $0x10] sm:$0xf] %v717
    %750 = vst [vmem:[#allocation9 + $0x14] sm:$0xf] %v718
    %751 = vst [vmem:[#allocation9 + $0x18] sm:$0xf] %v719
    %752 = vst [vmem:[#allocation9 + $0x1c] sm:$0xf] %v720
    %753 = vst [vmem:[#allocation9 + $0x20] sm:$0xf] %v721
    %754 = vst [vmem:[#allocation9 + $0x24] sm:$0xf] %v722
    %755 = vst [vmem:[#allocation9 + $0x28] sm:$0xf] %v723
    %756 = vst [vmem:[#allocation9 + $0x2c] sm:$0xf] %v724
    %757 = vst [vmem:[#allocation9 + $0x30] sm:$0xf] %v725
    %758 = vst [vmem:[#allocation9 + $0x34] sm:$0xf] %v726
    %759 = vst [vmem:[#allocation9 + $0x38] sm:$0xf] %v727
    %760 = vst [vmem:[#allocation9 + $0x3c] sm:$0xf] %v728
    // Predicated region
    $region34: #{tpu_custom_call.1} parent=1 // pred_check
      _
    $region35: #{tpu_custom_call.1} parent=1 // pred_check_branch
      %762 = sbr.rel (0) target = $region37
    $region36: #{tpu_custom_call.1} parent=1 // pred_region
      %s763 = sadd.s32 0, 0
      %s764 = smul.u32 16, %s763
      %s766 = ssub.s32 1024, 1024
      %767 = vsyncadd [#allocation4], %s766
      %s768 = smul.addr %s764, 64
      %s769 = scalar_lea.hbm %s3, %s768
      %s770 = sshll.u32 [#allocation8], 4
      %s771 = int_to_ptr.vmem [resolvable:$true] %s770
      %776 = dma.vmem_to_hbm [thread:$0]  %s771, 1024, %s769, [#allocation4], 64, 64, 4
    $region37: #{tpu_custom_call.1} parent=1 // pred_fallthru
      _
    // Predicated region
    $region38: #{tpu_custom_call.1} parent=1 // pred_check
      _
    $region39: #{tpu_custom_call.1} parent=1 // pred_check_branch
      %778 = sbr.rel (0) target = $region41
    $region40: #{tpu_custom_call.1} parent=1 // pred_region
      %s779 = sadd.s32 0, 0
      %s780 = smul.u32 16, %s779
      %s782 = ssub.s32 1024, 1024
      %783 = vsyncadd [#allocation10], %s782
      %s784 = smul.addr %s780, 64
      %s785 = scalar_lea.hbm %s4, %s784
      %s786 = sshll.u32 [#allocation9], 4
      %s787 = int_to_ptr.vmem [resolvable:$true] %s786
      %792 = dma.vmem_to_hbm [thread:$0]  %s787, 1024, %s785, [#allocation10], 64, 64, 4
    $region41: #{tpu_custom_call.1} parent=1 // pred_fallthru
      _
    // Predicated region
    $region42: #{tpu_custom_call.1} parent=1 // pred_check
      _
    $region43: #{tpu_custom_call.1} parent=1 // pred_check_branch
      %794 = sbr.rel (0) target = $region45
    $region44: #{tpu_custom_call.1} parent=1 // pred_region
      %s796 = ssub.s32 16, 16
      %797 = vsyncadd [#allocation10], %s796
      %s799 = sshll.u32 [#allocation11], 4
      %s800 = int_to_ptr.vmem [resolvable:$true] %s799
      %802 = dma.vmem_to_hbm [thread:$0]  %s800, 16, %s5, [#allocation10]
    $region45: #{tpu_custom_call.1} parent=1 // pred_fallthru
      _
    // Predicated region
    $region46: #{tpu_custom_call.1} parent=1 // pred_check
      _
    $region47: #{tpu_custom_call.1} parent=1 // pred_check_branch
      %804 = sbr.rel (0) target = $region49
    $region48: #{tpu_custom_call.1} parent=1 // pred_region
      %s806 = ssub.s32 16, 16
      %807 = vsyncadd [#allocation13], %s806
      %s809 = sshll.u32 [#allocation12], 4
      %s810 = int_to_ptr.vmem [resolvable:$true] %s809
      %812 = dma.vmem_to_hbm [thread:$0]  %s810, 16, %s6, [#allocation13]
    $region49: #{tpu_custom_call.1} parent=1 // pred_fallthru
      _
    // Predicated region
    $region50: #{tpu_custom_call.1} parent=1 // pred_check
      _
    $region51: #{tpu_custom_call.1} parent=1 // pred_check_branch
      %814 = sbr.rel (0) target = $region53
    $region52: #{tpu_custom_call.1} parent=1 // pred_region
      %s816 = ssub.s32 16, 16
      %817 = vsyncadd [#allocation13], %s816
      %s819 = sshll.u32 [#allocation14], 4
      %s820 = int_to_ptr.vmem [resolvable:$true] %s819
      %822 = dma.vmem_to_hbm [thread:$0]  %s820, 16, %s7, [#allocation13]
    $region53: #{tpu_custom_call.1} parent=1 // pred_fallthru
      _
    // Predicated region
    $region54: #{tpu_custom_call.1} parent=1 // pred_check
      _
    $region55: #{tpu_custom_call.1} parent=1 // pred_check_branch
      %824 = sbr.rel (0) target = $region57
    $region56: #{tpu_custom_call.1} parent=1 // pred_region
      %s826 = ssub.s32 16, 16
      %827 = vsyncadd [#allocation16], %s826
      %s829 = sshll.u32 [#allocation15], 4
      %s830 = int_to_ptr.vmem [resolvable:$true] %s829
      %832 = dma.vmem_to_hbm [thread:$0]  %s830, 16, %s8, [#allocation16]
    $region57: #{tpu_custom_call.1} parent=1 // pred_fallthru
      _
    // Predicated region
    $region58: #{tpu_custom_call.1} parent=1 // pred_check
      _
    $region59: #{tpu_custom_call.1} parent=1 // pred_check_branch
      %834 = sbr.rel (0) target = $region61
    $region60: #{tpu_custom_call.1} parent=1 // pred_region
      %835 = dma.done [#allocation4], 1024
    $region61: #{tpu_custom_call.1} parent=1 // pred_fallthru
      _
    // Predicated region
    $region62: #{tpu_custom_call.1} parent=1 // pred_check
      _
    $region63: #{tpu_custom_call.1} parent=1 // pred_check_branch
      %837 = sbr.rel (0) target = $region65
    $region64: #{tpu_custom_call.1} parent=1 // pred_region
      %838 = dma.done [#allocation10], 1024
    $region65: #{tpu_custom_call.1} parent=1 // pred_fallthru
      _
    // Predicated region
    $region66: #{tpu_custom_call.1} parent=1 // pred_check
      _
    $region67: #{tpu_custom_call.1} parent=1 // pred_check_branch
      %840 = sbr.rel (0) target = $region69
    $region68: #{tpu_custom_call.1} parent=1 // pred_region
      %841 = dma.done [#allocation10], 16
    $region69: #{tpu_custom_call.1} parent=1 // pred_fallthru
      _
    // Predicated region
    $region70: #{tpu_custom_call.1} parent=1 // pred_check
      _
    $region71: #{tpu_custom_call.1} parent=1 // pred_check_branch
      %843 = sbr.rel (0) target = $region73
    $region72: #{tpu_custom_call.1} parent=1 // pred_region
      %844 = dma.done [#allocation13], 16
    $region73: #{tpu_custom_call.1} parent=1 // pred_fallthru
      _
    // Predicated region
    $region74: #{tpu_custom_call.1} parent=1 // pred_check
      _
    $region75: #{tpu_custom_call.1} parent=1 // pred_check_branch
      %846 = sbr.rel (0) target = $region77
    $region76: #{tpu_custom_call.1} parent=1 // pred_region
      %847 = dma.done [#allocation13], 16
    $region77: #{tpu_custom_call.1} parent=1 // pred_fallthru
      _
    // Predicated region
    $region78: #{tpu_custom_call.1} parent=1 // pred_check
      _
    $region79: #{tpu_custom_call.1} parent=1 // pred_check_branch
      %849 = sbr.rel (0) target = $region81
    $region80: #{tpu_custom_call.1} parent=1 // pred_region
      %850 = dma.done [#allocation16], 16
    $region81: #{tpu_custom_call.1} parent=1 // pred_fallthru
      _
    %851 = vsyncpa [#allocation3], 1
    %852 = vsyncpa [#allocation6], 1
    %853 = vsyncpa [#allocation4], 1
    %854 = vsyncpa [#allocation10], 1
    %855 = vsyncpa [#allocation13], 1
    %856 = vsyncpa [#allocation16], 1

</llo_original>
